<compile_context>
chip_gen: v7x
topology: tpu7x:2x2x1
jax: 0.10.0
libtpu: 0.0.40
codegen_flags: <defaults>
</compile_context>

<pallas_src>
import functools
import math

import numpy as np

import jax
import jax.numpy as jnp
from jax import lax
from jax.experimental import pallas as pl
from jax.experimental.pallas import tpu as pltpu

K = 5                 # taps of each depthwise kernel (kernel_size=(1,5))
DIL = 3               # dilation of conv_spatial_h
PAD0 = (K - 1) // 2   # padding of conv0h            -> 2
PAD1 = 6              # padding of conv_spatial_h    -> 6

OFFS0 = tuple(k - PAD0 for k in range(K))        # (-2, -1, 0, 1, 2)
OFFS1 = tuple(k * DIL - PAD1 for k in range(K))  # (-6, -3, 0, 3, 6)


# --------------------------------------------------------------------------------------------
# Kernel
# --------------------------------------------------------------------------------------------
def _lska_h_kernel(x_ref, m_ref, w0_ref, b0_ref, w1_ref, b1_ref, wp_ref, bp_ref,
                   o_ref, *, taps0, taps1, use_mxu):
    """One (batch, row-tile) grid step.

    x_ref / o_ref : (C, L) with L = RT * W_pad  (RT image rows folded onto lanes)
    m_ref         : (n_offs, 1, L) precomputed 0/1 boundary masks, one row per nonzero offset
    w0/w1         : (K, C, 1) depthwise taps, sublane-major (compute dtype)
    b0/b1         : (C, 1)    depthwise biases (compute dtype)
    wp            : (C, C)    1x1-conv weight
    bp            : (C, 1)    1x1-conv bias (f32)
    """
    x_in = x_ref[...]                      # (C, L), input dtype (kept for the final u * attn)
    cdt = w0_ref.dtype                     # vector-math dtype (f32, or bf16 on v6e/v7x)
    xc = x_in.astype(cdt)
    L = xc.shape[-1]

    def dw_conv_w(v, w_ref, b_ref, taps):
        """Depthwise 1xK conv along W ('same' zero padding): XLU lane rolls gated by the
        precomputed per-offset masks (single broadcast multiply per tap)."""
        acc = None
        for k, (s, mrow) in enumerate(taps):
            t = w_ref[k]                                   # (C, 1), sublane-major -> free bcast
            if s == 0:
                term = t * v
            else:
                shifted = pltpu.roll(v, shift=(-s) % L, axis=1)
                term = t * (shifted * m_ref[mrow])         # mask mult replaces cmp/cmp/and/sel
            acc = term if acc is None else acc + term
        return acc + b_ref[...]                            # (C, 1) bias, no relayout

    # conv0h:         depthwise (1,5), padding (0,2)
    y1 = dw_conv_w(xc, w0_ref, b0_ref, taps0)
    # conv_spatial_h: depthwise (1,5), dilation 3, padding (0,6)
    y2 = dw_conv_w(y1, w1_ref, b1_ref, taps1)

    # conv1: pointwise 1x1 channel mixing.
    if use_mxu:
        # Lane-dense MXU matmul, f32 accumulation (operands may be bf16 on v6e/v7x).
        attn = jnp.dot(wp_ref[...], y2, preferred_element_type=jnp.float32)
    else:
        # Tiny C: a CxC matmul is MXU-latency-bound; C broadcast-FMAs on the VPU are cheaper.
        wpf = wp_ref[...]                                  # (C, C) f32
        y2f = y2.astype(jnp.float32)
        attn = None
        for c in range(wpf.shape[1]):                      # bounded unroll (only used for C<=32)
            term = wpf[:, c:c + 1] * y2f[c:c + 1, :]
            attn = term if attn is None else attn + term
    attn = attn + bp_ref[...]                              # (C, 1) f32 bias

    # u * attn
    o_ref[...] = (x_in.astype(jnp.float32) * attn).astype(o_ref.dtype)


# --------------------------------------------------------------------------------------------
# Tiling / VMEM sizing helpers (generation-aware)
# --------------------------------------------------------------------------------------------
def _vmem_capacity_bytes():
    try:
        return int(pltpu.get_tpu_info().vmem_capacity_bytes)
    except Exception:
        return 64 << 20                     # conservative fallback (v7x per-core figure)


def _vmem_working_set_budget():
    # ~24 MiB per-step working set on 128-MiB chips (v5e/v6e), ~12 MiB on 64-MiB v7x,
    # leaving room for double-buffering and compiler scratch.
    return min(_vmem_capacity_bytes() // 5, 24 << 20)


def _padded_width(H, W):
    """Smallest W_pad >= W such that H * W_pad is a multiple of 128 (so the full-image row
    tile always yields a 128-aligned lane dim -> unmasked vector stores)."""
    step = 128 // math.gcd(H, 128)
    return ((W + step - 1) // step) * step


def _pick_row_tile(N, C, H, W, itemsize, budget_bytes):
    """Pick a row tile RT (divisor of H) with RT*W a 128 multiple, folded lane width near ~1K
    lanes (>=512 reaches ~85% of HBM roofline), working set within the budget, and a grid of
    at least 2 steps (megacore on v7x)."""
    cands = [rt for rt in range(1, H + 1) if H % rt == 0 and (rt * W) % 128 == 0]
    # W has been padded so rt == H always qualifies.

    def step_bytes(rt):
        # 2x double-buffered in + out tiles, plus ~10 live compute-width temps (counted at f32).
        return (4 * itemsize + 10 * 4) * C * rt * W

    fitting = [rt for rt in cands if step_bytes(rt) <= budget_bytes] or [min(cands)]
    pick = min(fitting, key=lambda rt: abs(rt * W - 1024))
    # Guarantee >= 2 grid steps so both v7x TensorCores get work (costs at most one extra
    # ~0.35 us step on single-core chips).
    if N * (H // pick) < 2:
        smaller = [rt for rt in fitting if rt < pick]
        if smaller:
            pick = max(smaller)
    return pick


# --------------------------------------------------------------------------------------------
# Wrapper
# --------------------------------------------------------------------------------------------
def lska_h_forward(x, params, *, row_tile=None, compute_dtype=jnp.float32, use_mxu=None):
    """x: (N, C, H, W); params = (w0, b0, w1, b1, wp, bp).

    compute_dtype: dtype of the depthwise-conv vector math.  jnp.float32 (default, exact,
    right for v5e) or jnp.bfloat16 (recommended on bf16-native v6e/v7x: ~2x VPU throughput,
    half the VMEM footprint; 1x1 conv and u*attn still accumulate in f32).
    """
    N, C, H, W = x.shape
    w0, b0, w1, b1, wp, bp = params
    if use_mxu is None:
        use_mxu = C > 32
    cdt = jnp.dtype(compute_dtype)

    # Params: cast once in the wrapper, presented sublane-major so in-kernel broadcasts are
    # relayout-free ((K, C, 1) taps, (C, 1) biases).
    w0t = jnp.asarray(w0, cdt).T.reshape(K, C, 1)
    w1t = jnp.asarray(w1, cdt).T.reshape(K, C, 1)
    b0c = jnp.asarray(b0, cdt).reshape(C, 1)
    b1c = jnp.asarray(b1, cdt).reshape(C, 1)
    wpc = jnp.asarray(wp, cdt if use_mxu else jnp.float32)
    bpc = jnp.asarray(bp, jnp.float32).reshape(C, 1)

    # Lane alignment: pad W (rare) so the folded lane dim is always a 128 multiple.
    W_pad = _padded_width(H, W)
    x_p = x if W_pad == W else jnp.pad(x, ((0, 0), (0, 0), (0, 0), (0, W_pad - W)))

    if row_tile is None:
        RT = _pick_row_tile(N, C, H, W_pad, x.dtype.itemsize, _vmem_working_set_budget())
    else:
        RT = row_tile
    assert H % RT == 0 and (RT * W_pad) % 128 == 0, "row_tile must divide H and 128-align lanes"
    L = RT * W_pad
    GH = H // RT

    # Boundary masks: one 0/1 row per nonzero tap offset, resident for the whole grid.
    offs = sorted({s for s in OFFS0 + OFFS1 if s != 0})
    row_of = {s: i for i, s in enumerate(offs)}
    col = np.arange(L) % W_pad
    masks_np = np.stack([((col + s >= 0) & (col + s < W)).astype(np.float32) for s in offs])
    masks = jnp.asarray(masks_np.reshape(len(offs), 1, L), cdt)

    taps0 = tuple((s, row_of.get(s, -1)) for s in OFFS0)
    taps1 = tuple((s, row_of.get(s, -1)) for s in OFFS1)

    # Contiguous (free) wrapper-side reshape: fold rows onto the lane axis.
    x2 = x_p.reshape(N, C, H * W_pad)

    kernel = functools.partial(_lska_h_kernel, taps0=taps0, taps1=taps1, use_mxu=use_mxu)

    def const_spec(shape):
        return pl.BlockSpec(shape, lambda n, h: (0,) * len(shape))

    # Derive the VMEM limit from the actual tile sizes (double-buffered in/out tiles + live
    # compute-width temps + resident constants), capped below the chip's physical VMEM.
    need = (4 * x.dtype.itemsize + 10 * cdt.itemsize) * C * L
    need += masks.size * cdt.itemsize + wpc.size * wpc.dtype.itemsize + (1 << 20)
    vmem_limit = int(min(max(need, 32 << 20), _vmem_capacity_bytes() * 3 // 4))

    out2 = pl.pallas_call(
        kernel,
        out_shape=jax.ShapeDtypeStruct((N, C, H * W_pad), x.dtype),
        grid_spec=pltpu.PrefetchScalarGridSpec(
            num_scalar_prefetch=0,
            grid=(N, GH),
            in_specs=[
                pl.BlockSpec((None, C, L), lambda n, h: (n, 0, h)),   # x (row-tiled)
                const_spec((len(offs), 1, L)),   # boundary masks
                const_spec((K, C, 1)),           # conv0h taps
                const_spec((C, 1)),              # conv0h bias
                const_spec((K, C, 1)),           # conv_spatial_h taps
                const_spec((C, 1)),              # conv_spatial_h bias
                const_spec((C, C)),              # conv1 weight
                const_spec((C, 1)),              # conv1 bias
            ],
            out_specs=pl.BlockSpec((None, C, L), lambda n, h: (n, 0, h)),
        ),
        compiler_params=pltpu.CompilerParams(
            dimension_semantics=("parallel", "parallel"),   # megacore shard on v7x
            vmem_limit_bytes=vmem_limit),
    )(x2, masks, w0t, b0c, w1t, b1c, wpc, bpc)

    out = out2.reshape(N, C, H, W_pad)
    if W_pad != W:
        out = out[..., :W]
    return out


# --------------------------------------------------------------------------------------------
# Pure-JAX reference (lax.conv, NCHW, cross-correlation — matches PyTorch Conv2d)
# --------------------------------------------------------------------------------------------
def ref_forward(x, params):
    w0, b0, w1, b1, wp, bp = params
    C = x.shape[1]
    dn = lax.conv_dimension_numbers(x.shape, (C, 1, 1, K), ('NCHW', 'OIHW', 'NCHW'))
    a = lax.conv_general_dilated(
        x, w0.reshape(C, 1, 1, K), (1, 1), ((0, 0), (PAD0, PAD0)),
        dimension_numbers=dn, feature_group_count=C)
    a = a + b0.reshape(1, C, 1, 1)
    a = lax.conv_general_dilated(
        a, w1.reshape(C, 1, 1, K), (1, 1), ((0, 0), (PAD1, PAD1)),
        rhs_dilation=(1, DIL), dimension_numbers=dn, feature_group_count=C)
    a = a + b1.reshape(1, C, 1, 1)
    a = lax.conv_general_dilated(
        a, wp.reshape(C, C, 1, 1), (1, 1), ((0, 0), (0, 0)), dimension_numbers=dn)
    a = a + bp.reshape(1, C, 1, 1)
    return x * a


if __name__ == "__main__":
    key = jax.random.PRNGKey(0)
    N, C, H, W = 2, 4, 16, 16
    ks = jax.random.split(key, 7)

    x = jax.random.normal(ks[0], (N, C, H, W), jnp.float32)
    # Parameters (shapes implied by LSKA_h.__init__):
    #   conv0h:         weight (C,1,1,5) -> stored as (C,5), bias (C,)
    #   conv_spatial_h: weight (C,1,1,5) -> stored as (C,5), bias (C,)
    #   conv1:          weight (C,C,1,1) -> stored as (C,C), bias (C,)
    w0 = jax.random.normal(ks[1], (C, K), jnp.float32) * 0.2
    b0 = jax.random.normal(ks[2], (C,),   jnp.float32) * 0.1
    w1 = jax.random.normal(ks[3], (C, K), jnp.float32) * 0.2
    b1 = jax.random.normal(ks[4], (C,),   jnp.float32) * 0.1
    wp = jax.random.normal(ks[5], (C, C), jnp.float32) * 0.2
    bp = jax.random.normal(ks[6], (C,),   jnp.float32) * 0.1
    params = (w0, b0, w1, b1, wp, bp)

    ref = ref_forward(x, params)

    # 1) Default: auto tile (RT=16, 256 lanes, grid (2,1)), small-C VPU path for the 1x1 conv.
    out = lska_h_forward(x, params)
    jax.block_until_ready(out)
    err = float(jnp.max(jnp.abs(out - ref)))
    assert jnp.allclose(out, ref, atol=1e-4, rtol=1e-4), f"max abs err {err}"

    # 2) MXU path for the 1x1 conv (what large-C configs use).
    out_m = lska_h_forward(x, params, use_mxu=True)
    jax.block_until_ready(out_m)
    err_m = float(jnp.max(jnp.abs(out_m - ref)))
    assert jnp.allclose(out_m, ref, atol=1e-4, rtol=1e-4), f"max abs err {err_m}"

    # 3) H-tiled path: RT = 8 (128 lanes), grid (2, 2).
    out_t = lska_h_forward(x, params, row_tile=8)
    jax.block_until_ready(out_t)
    err_t = float(jnp.max(jnp.abs(out_t - ref)))
    assert jnp.allclose(out_t, ref, atol=1e-4, rtol=1e-4), f"max abs err {err_t}"

    # 4) Optional bf16 vector-math path (recommended on bf16-native v6e/v7x; keep f32 on v5e).
    #    Best-effort smoke test: skipped silently if this chip/toolchain can't lower 16-bit
    #    lane rolls; if it runs, it must be accurate to bf16 tolerance.
    bf16_ok = True
    try:
        out_bf = lska_h_forward(x, params, compute_dtype=jnp.bfloat16)
        jax.block_until_ready(out_bf)
        bf16_ok = bool(jnp.allclose(out_bf, ref, atol=1e-1, rtol=1e-1))
    except Exception:
        pass
    assert bf16_ok, "bf16 compute path produced inaccurate results"

    print("KERNEL_OK")
</pallas_src>

<mosaic_0001>
module attributes {stable_mosaic.version = 11 : i64} {
  func.func @_lska_h_kernel(%arg0: i32, %arg1: i32, %arg2: memref<1x4x256xf32, #tpu.memory_space<vmem>>, %arg3: memref<8x1x256xf32, #tpu.memory_space<vmem>>, %arg4: memref<5x4x1xf32, #tpu.memory_space<vmem>>, %arg5: memref<4x1xf32, #tpu.memory_space<vmem>>, %arg6: memref<5x4x1xf32, #tpu.memory_space<vmem>>, %arg7: memref<4x1xf32, #tpu.memory_space<vmem>>, %arg8: memref<4x4xf32, #tpu.memory_space<vmem>>, %arg9: memref<4x1xf32, #tpu.memory_space<vmem>>, %arg10: memref<1x4x256xf32, #tpu.memory_space<vmem>>) attributes {dimension_semantics = [#tpu.dimension_semantics<parallel>, #tpu.dimension_semantics<parallel>], iteration_bounds = array<i64: 2, 1>, scalar_prefetch = 0 : i64, scratch_operands = 0 : i64, tpu.core_type = #tpu.core_type<tc>, window_params = [{transform_indices = @transform_0, window_bounds = array<i64: 1, 4, 256>}, {pipeline_mode = #tpu.pipeline_mode<synchronous>, transform_indices = @transform_1, window_bounds = array<i64: 8, 1, 256>}, {pipeline_mode = #tpu.pipeline_mode<synchronous>, transform_indices = @transform_2, window_bounds = array<i64: 5, 4, 1>}, {pipeline_mode = #tpu.pipeline_mode<synchronous>, transform_indices = @transform_3, window_bounds = array<i64: 4, 1>}, {pipeline_mode = #tpu.pipeline_mode<synchronous>, transform_indices = @transform_4, window_bounds = array<i64: 5, 4, 1>}, {pipeline_mode = #tpu.pipeline_mode<synchronous>, transform_indices = @transform_5, window_bounds = array<i64: 4, 1>}, {pipeline_mode = #tpu.pipeline_mode<synchronous>, transform_indices = @transform_6, window_bounds = array<i64: 4, 4>}, {pipeline_mode = #tpu.pipeline_mode<synchronous>, transform_indices = @transform_7, window_bounds = array<i64: 4, 1>}, {transform_indices = @transform_8, window_bounds = array<i64: 1, 4, 256>}]} {
    %c0 = arith.constant 0 : index
    %c0_0 = arith.constant 0 : index
    %c0_1 = arith.constant 0 : index
    %0 = vector.load %arg2[%c0, %c0_0, %c0_1] : memref<1x4x256xf32, #tpu.memory_space<vmem>>, vector<1x4x256xf32>
    %1 = vector.shape_cast %0 : vector<1x4x256xf32> to vector<4x256xf32>
    %c0_2 = arith.constant 0 : index
    %c0_3 = arith.constant 0 : index
    %c0_4 = arith.constant 0 : index
    %2 = vector.load %arg4[%c0_2, %c0_3, %c0_4] : memref<5x4x1xf32, #tpu.memory_space<vmem>>, vector<1x4x1xf32>
    %3 = vector.shape_cast %2 : vector<1x4x1xf32> to vector<4x1xf32>
    %c2_i32 = arith.constant 2 : i32
    %4 = tpu.dynamic_rotate %1 by %c2_i32 dim 1 : vector<4x256xf32>, i32 -> vector<4x256xf32>
    %c2 = arith.constant 2 : index
    %c0_5 = arith.constant 0 : index
    %c0_6 = arith.constant 0 : index
    %5 = vector.load %arg3[%c2, %c0_5, %c0_6] : memref<8x1x256xf32, #tpu.memory_space<vmem>>, vector<1x1x256xf32>
    %6 = vector.shape_cast %5 : vector<1x1x256xf32> to vector<1x256xf32>
    %7 = vector.broadcast %6 : vector<1x256xf32> to vector<4x256xf32>
    %8 = arith.mulf %4, %7 : vector<4x256xf32>
    %9 = vector.broadcast %3 : vector<4x1xf32> to vector<4x256xf32>
    %10 = arith.mulf %9, %8 : vector<4x256xf32>
    %c1 = arith.constant 1 : index
    %c0_7 = arith.constant 0 : index
    %c0_8 = arith.constant 0 : index
    %11 = vector.load %arg4[%c1, %c0_7, %c0_8] : memref<5x4x1xf32, #tpu.memory_space<vmem>>, vector<1x4x1xf32>
    %12 = vector.shape_cast %11 : vector<1x4x1xf32> to vector<4x1xf32>
    %c1_i32 = arith.constant 1 : i32
    %13 = tpu.dynamic_rotate %1 by %c1_i32 dim 1 : vector<4x256xf32>, i32 -> vector<4x256xf32>
    %c3 = arith.constant 3 : index
    %c0_9 = arith.constant 0 : index
    %c0_10 = arith.constant 0 : index
    %14 = vector.load %arg3[%c3, %c0_9, %c0_10] : memref<8x1x256xf32, #tpu.memory_space<vmem>>, vector<1x1x256xf32>
    %15 = vector.shape_cast %14 : vector<1x1x256xf32> to vector<1x256xf32>
    %16 = vector.broadcast %15 : vector<1x256xf32> to vector<4x256xf32>
    %17 = arith.mulf %13, %16 : vector<4x256xf32>
    %18 = vector.broadcast %12 : vector<4x1xf32> to vector<4x256xf32>
    %19 = arith.mulf %18, %17 : vector<4x256xf32>
    %20 = arith.addf %10, %19 : vector<4x256xf32>
    %c2_11 = arith.constant 2 : index
    %c0_12 = arith.constant 0 : index
    %c0_13 = arith.constant 0 : index
    %21 = vector.load %arg4[%c2_11, %c0_12, %c0_13] : memref<5x4x1xf32, #tpu.memory_space<vmem>>, vector<1x4x1xf32>
    %22 = vector.shape_cast %21 : vector<1x4x1xf32> to vector<4x1xf32>
    %23 = vector.broadcast %22 : vector<4x1xf32> to vector<4x256xf32>
    %24 = arith.mulf %23, %1 : vector<4x256xf32>
    %25 = arith.addf %20, %24 : vector<4x256xf32>
    %c3_14 = arith.constant 3 : index
    %c0_15 = arith.constant 0 : index
    %c0_16 = arith.constant 0 : index
    %26 = vector.load %arg4[%c3_14, %c0_15, %c0_16] : memref<5x4x1xf32, #tpu.memory_space<vmem>>, vector<1x4x1xf32>
    %27 = vector.shape_cast %26 : vector<1x4x1xf32> to vector<4x1xf32>
    %c255_i32 = arith.constant 255 : i32
    %28 = tpu.dynamic_rotate %1 by %c255_i32 dim 1 : vector<4x256xf32>, i32 -> vector<4x256xf32>
    %c4 = arith.constant 4 : index
    %c0_17 = arith.constant 0 : index
    %c0_18 = arith.constant 0 : index
    %29 = vector.load %arg3[%c4, %c0_17, %c0_18] : memref<8x1x256xf32, #tpu.memory_space<vmem>>, vector<1x1x256xf32>
    %30 = vector.shape_cast %29 : vector<1x1x256xf32> to vector<1x256xf32>
    %31 = vector.broadcast %30 : vector<1x256xf32> to vector<4x256xf32>
    %32 = arith.mulf %28, %31 : vector<4x256xf32>
    %33 = vector.broadcast %27 : vector<4x1xf32> to vector<4x256xf32>
    %34 = arith.mulf %33, %32 : vector<4x256xf32>
    %35 = arith.addf %25, %34 : vector<4x256xf32>
    %c4_19 = arith.constant 4 : index
    %c0_20 = arith.constant 0 : index
    %c0_21 = arith.constant 0 : index
    %36 = vector.load %arg4[%c4_19, %c0_20, %c0_21] : memref<5x4x1xf32, #tpu.memory_space<vmem>>, vector<1x4x1xf32>
    %37 = vector.shape_cast %36 : vector<1x4x1xf32> to vector<4x1xf32>
    %c254_i32 = arith.constant 254 : i32
    %38 = tpu.dynamic_rotate %1 by %c254_i32 dim 1 : vector<4x256xf32>, i32 -> vector<4x256xf32>
    %c5 = arith.constant 5 : index
    %c0_22 = arith.constant 0 : index
    %c0_23 = arith.constant 0 : index
    %39 = vector.load %arg3[%c5, %c0_22, %c0_23] : memref<8x1x256xf32, #tpu.memory_space<vmem>>, vector<1x1x256xf32>
    %40 = vector.shape_cast %39 : vector<1x1x256xf32> to vector<1x256xf32>
    %41 = vector.broadcast %40 : vector<1x256xf32> to vector<4x256xf32>
    %42 = arith.mulf %38, %41 : vector<4x256xf32>
    %43 = vector.broadcast %37 : vector<4x1xf32> to vector<4x256xf32>
    %44 = arith.mulf %43, %42 : vector<4x256xf32>
    %45 = arith.addf %35, %44 : vector<4x256xf32>
    %c0_24 = arith.constant 0 : index
    %c0_25 = arith.constant 0 : index
    %46 = vector.load %arg5[%c0_24, %c0_25] : memref<4x1xf32, #tpu.memory_space<vmem>>, vector<4x1xf32>
    %47 = vector.broadcast %46 : vector<4x1xf32> to vector<4x256xf32>
    %48 = arith.addf %45, %47 : vector<4x256xf32>
    %c0_26 = arith.constant 0 : index
    %c0_27 = arith.constant 0 : index
    %c0_28 = arith.constant 0 : index
    %49 = vector.load %arg6[%c0_26, %c0_27, %c0_28] : memref<5x4x1xf32, #tpu.memory_space<vmem>>, vector<1x4x1xf32>
    %50 = vector.shape_cast %49 : vector<1x4x1xf32> to vector<4x1xf32>
    %c6_i32 = arith.constant 6 : i32
    %51 = tpu.dynamic_rotate %48 by %c6_i32 dim 1 : vector<4x256xf32>, i32 -> vector<4x256xf32>
    %c0_29 = arith.constant 0 : index
    %c0_30 = arith.constant 0 : index
    %c0_31 = arith.constant 0 : index
    %52 = vector.load %arg3[%c0_29, %c0_30, %c0_31] : memref<8x1x256xf32, #tpu.memory_space<vmem>>, vector<1x1x256xf32>
    %53 = vector.shape_cast %52 : vector<1x1x256xf32> to vector<1x256xf32>
    %54 = vector.broadcast %53 : vector<1x256xf32> to vector<4x256xf32>
    %55 = arith.mulf %51, %54 : vector<4x256xf32>
    %56 = vector.broadcast %50 : vector<4x1xf32> to vector<4x256xf32>
    %57 = arith.mulf %56, %55 : vector<4x256xf32>
    %c1_32 = arith.constant 1 : index
    %c0_33 = arith.constant 0 : index
    %c0_34 = arith.constant 0 : index
    %58 = vector.load %arg6[%c1_32, %c0_33, %c0_34] : memref<5x4x1xf32, #tpu.memory_space<vmem>>, vector<1x4x1xf32>
    %59 = vector.shape_cast %58 : vector<1x4x1xf32> to vector<4x1xf32>
    %c3_i32 = arith.constant 3 : i32
    %60 = tpu.dynamic_rotate %48 by %c3_i32 dim 1 : vector<4x256xf32>, i32 -> vector<4x256xf32>
    %c1_35 = arith.constant 1 : index
    %c0_36 = arith.constant 0 : index
    %c0_37 = arith.constant 0 : index
    %61 = vector.load %arg3[%c1_35, %c0_36, %c0_37] : memref<8x1x256xf32, #tpu.memory_space<vmem>>, vector<1x1x256xf32>
    %62 = vector.shape_cast %61 : vector<1x1x256xf32> to vector<1x256xf32>
    %63 = vector.broadcast %62 : vector<1x256xf32> to vector<4x256xf32>
    %64 = arith.mulf %60, %63 : vector<4x256xf32>
    %65 = vector.broadcast %59 : vector<4x1xf32> to vector<4x256xf32>
    %66 = arith.mulf %65, %64 : vector<4x256xf32>
    %67 = arith.addf %57, %66 : vector<4x256xf32>
    %c2_38 = arith.constant 2 : index
    %c0_39 = arith.constant 0 : index
    %c0_40 = arith.constant 0 : index
    %68 = vector.load %arg6[%c2_38, %c0_39, %c0_40] : memref<5x4x1xf32, #tpu.memory_space<vmem>>, vector<1x4x1xf32>
    %69 = vector.shape_cast %68 : vector<1x4x1xf32> to vector<4x1xf32>
    %70 = vector.broadcast %69 : vector<4x1xf32> to vector<4x256xf32>
    %71 = arith.mulf %70, %48 : vector<4x256xf32>
    %72 = arith.addf %67, %71 : vector<4x256xf32>
    %c3_41 = arith.constant 3 : index
    %c0_42 = arith.constant 0 : index
    %c0_43 = arith.constant 0 : index
    %73 = vector.load %arg6[%c3_41, %c0_42, %c0_43] : memref<5x4x1xf32, #tpu.memory_space<vmem>>, vector<1x4x1xf32>
    %74 = vector.shape_cast %73 : vector<1x4x1xf32> to vector<4x1xf32>
    %c253_i32 = arith.constant 253 : i32
    %75 = tpu.dynamic_rotate %48 by %c253_i32 dim 1 : vector<4x256xf32>, i32 -> vector<4x256xf32>
    %c6 = arith.constant 6 : index
    %c0_44 = arith.constant 0 : index
    %c0_45 = arith.constant 0 : index
    %76 = vector.load %arg3[%c6, %c0_44, %c0_45] : memref<8x1x256xf32, #tpu.memory_space<vmem>>, vector<1x1x256xf32>
    %77 = vector.shape_cast %76 : vector<1x1x256xf32> to vector<1x256xf32>
    %78 = vector.broadcast %77 : vector<1x256xf32> to vector<4x256xf32>
    %79 = arith.mulf %75, %78 : vector<4x256xf32>
    %80 = vector.broadcast %74 : vector<4x1xf32> to vector<4x256xf32>
    %81 = arith.mulf %80, %79 : vector<4x256xf32>
    %82 = arith.addf %72, %81 : vector<4x256xf32>
    %c4_46 = arith.constant 4 : index
    %c0_47 = arith.constant 0 : index
    %c0_48 = arith.constant 0 : index
    %83 = vector.load %arg6[%c4_46, %c0_47, %c0_48] : memref<5x4x1xf32, #tpu.memory_space<vmem>>, vector<1x4x1xf32>
    %84 = vector.shape_cast %83 : vector<1x4x1xf32> to vector<4x1xf32>
    %c250_i32 = arith.constant 250 : i32
    %85 = tpu.dynamic_rotate %48 by %c250_i32 dim 1 : vector<4x256xf32>, i32 -> vector<4x256xf32>
    %c7 = arith.constant 7 : index
    %c0_49 = arith.constant 0 : index
    %c0_50 = arith.constant 0 : index
    %86 = vector.load %arg3[%c7, %c0_49, %c0_50] : memref<8x1x256xf32, #tpu.memory_space<vmem>>, vector<1x1x256xf32>
    %87 = vector.shape_cast %86 : vector<1x1x256xf32> to vector<1x256xf32>
    %88 = vector.broadcast %87 : vector<1x256xf32> to vector<4x256xf32>
    %89 = arith.mulf %85, %88 : vector<4x256xf32>
    %90 = vector.broadcast %84 : vector<4x1xf32> to vector<4x256xf32>
    %91 = arith.mulf %90, %89 : vector<4x256xf32>
    %92 = arith.addf %82, %91 : vector<4x256xf32>
    %c0_51 = arith.constant 0 : index
    %c0_52 = arith.constant 0 : index
    %93 = vector.load %arg7[%c0_51, %c0_52] : memref<4x1xf32, #tpu.memory_space<vmem>>, vector<4x1xf32>
    %94 = vector.broadcast %93 : vector<4x1xf32> to vector<4x256xf32>
    %95 = arith.addf %92, %94 : vector<4x256xf32>
    %c0_53 = arith.constant 0 : index
    %c0_54 = arith.constant 0 : index
    %96 = vector.load %arg8[%c0_53, %c0_54] : memref<4x4xf32, #tpu.memory_space<vmem>>, vector<4x4xf32>
    %97 = vector.extract_strided_slice %96 {offsets = [0, 0], sizes = [4, 1], strides = [1, 1]} : vector<4x4xf32> to vector<4x1xf32>
    %98 = vector.extract_strided_slice %95 {offsets = [0, 0], sizes = [1, 256], strides = [1, 1]} : vector<4x256xf32> to vector<1x256xf32>
    %99 = vector.broadcast %97 : vector<4x1xf32> to vector<4x256xf32>
    %100 = vector.broadcast %98 : vector<1x256xf32> to vector<4x256xf32>
    %101 = arith.mulf %99, %100 : vector<4x256xf32>
    %102 = vector.extract_strided_slice %96 {offsets = [0, 1], sizes = [4, 1], strides = [1, 1]} : vector<4x4xf32> to vector<4x1xf32>
    %103 = vector.extract_strided_slice %95 {offsets = [1, 0], sizes = [1, 256], strides = [1, 1]} : vector<4x256xf32> to vector<1x256xf32>
    %104 = vector.broadcast %102 : vector<4x1xf32> to vector<4x256xf32>
    %105 = vector.broadcast %103 : vector<1x256xf32> to vector<4x256xf32>
    %106 = arith.mulf %104, %105 : vector<4x256xf32>
    %107 = arith.addf %101, %106 : vector<4x256xf32>
    %108 = vector.extract_strided_slice %96 {offsets = [0, 2], sizes = [4, 1], strides = [1, 1]} : vector<4x4xf32> to vector<4x1xf32>
    %109 = vector.extract_strided_slice %95 {offsets = [2, 0], sizes = [1, 256], strides = [1, 1]} : vector<4x256xf32> to vector<1x256xf32>
    %110 = vector.broadcast %108 : vector<4x1xf32> to vector<4x256xf32>
    %111 = vector.broadcast %109 : vector<1x256xf32> to vector<4x256xf32>
    %112 = arith.mulf %110, %111 : vector<4x256xf32>
    %113 = arith.addf %107, %112 : vector<4x256xf32>
    %114 = vector.extract_strided_slice %96 {offsets = [0, 3], sizes = [4, 1], strides = [1, 1]} : vector<4x4xf32> to vector<4x1xf32>
    %115 = vector.extract_strided_slice %95 {offsets = [3, 0], sizes = [1, 256], strides = [1, 1]} : vector<4x256xf32> to vector<1x256xf32>
    %116 = vector.broadcast %114 : vector<4x1xf32> to vector<4x256xf32>
    %117 = vector.broadcast %115 : vector<1x256xf32> to vector<4x256xf32>
    %118 = arith.mulf %116, %117 : vector<4x256xf32>
    %119 = arith.addf %113, %118 : vector<4x256xf32>
    %c0_55 = arith.constant 0 : index
    %c0_56 = arith.constant 0 : index
    %120 = vector.load %arg9[%c0_55, %c0_56] : memref<4x1xf32, #tpu.memory_space<vmem>>, vector<4x1xf32>
    %121 = vector.broadcast %120 : vector<4x1xf32> to vector<4x256xf32>
    %122 = arith.addf %119, %121 : vector<4x256xf32>
    %123 = arith.mulf %1, %122 : vector<4x256xf32>
    %c0_57 = arith.constant 0 : index
    %c0_58 = arith.constant 0 : index
    %c0_59 = arith.constant 0 : index
    %124 = vector.load %arg10[%c0_57, %c0_58, %c0_59] : memref<1x4x256xf32, #tpu.memory_space<vmem>>, vector<1x4x256xf32>
    %125 = vector.shape_cast %124 : vector<1x4x256xf32> to vector<4x256xf32>
    %126 = vector.shape_cast %123 : vector<4x256xf32> to vector<1x4x256xf32>
    tpu.vector_store %arg10[%c0_57, %c0_58, %c0_59], %126 {strides = array<i32>} : memref<1x4x256xf32, #tpu.memory_space<vmem>>, vector<1x4x256xf32>,
    return
  }
  func.func @transform_0(%arg0: i32, %arg1: i32) -> (i32, i32, i32) {
    %c0_i32 = arith.constant 0 : i32
    %c0_i32_0 = arith.constant 0 : i32
    return %arg0, %c0_i32, %arg1 : i32, i32, i32
  }
  func.func @transform_1(%arg0: i32, %arg1: i32) -> (i32, i32, i32) {
    %c0_i32 = arith.constant 0 : i32
    %c0_i32_0 = arith.constant 0 : i32
    %c0_i32_1 = arith.constant 0 : i32
    %c0_i32_2 = arith.constant 0 : i32
    return %c0_i32, %c0_i32_0, %c0_i32_1 : i32, i32, i32
  }
  func.func @transform_2(%arg0: i32, %arg1: i32) -> (i32, i32, i32) {
    %c0_i32 = arith.constant 0 : i32
    %c0_i32_0 = arith.constant 0 : i32
    %c0_i32_1 = arith.constant 0 : i32
    %c0_i32_2 = arith.constant 0 : i32
    return %c0_i32, %c0_i32_0, %c0_i32_1 : i32, i32, i32
  }
  func.func @transform_3(%arg0: i32, %arg1: i32) -> (i32, i32) {
    %c0_i32 = arith.constant 0 : i32
    %c0_i32_0 = arith.constant 0 : i32
    %c0_i32_1 = arith.constant 0 : i32
    return %c0_i32, %c0_i32_0 : i32, i32
  }
  func.func @transform_4(%arg0: i32, %arg1: i32) -> (i32, i32, i32) {
    %c0_i32 = arith.constant 0 : i32
    %c0_i32_0 = arith.constant 0 : i32
    %c0_i32_1 = arith.constant 0 : i32
    %c0_i32_2 = arith.constant 0 : i32
    return %c0_i32, %c0_i32_0, %c0_i32_1 : i32, i32, i32
  }
  func.func @transform_5(%arg0: i32, %arg1: i32) -> (i32, i32) {
    %c0_i32 = arith.constant 0 : i32
    %c0_i32_0 = arith.constant 0 : i32
    %c0_i32_1 = arith.constant 0 : i32
    return %c0_i32, %c0_i32_0 : i32, i32
  }
  func.func @transform_6(%arg0: i32, %arg1: i32) -> (i32, i32) {
    %c0_i32 = arith.constant 0 : i32
    %c0_i32_0 = arith.constant 0 : i32
    %c0_i32_1 = arith.constant 0 : i32
    return %c0_i32, %c0_i32_0 : i32, i32
  }
  func.func @transform_7(%arg0: i32, %arg1: i32) -> (i32, i32) {
    %c0_i32 = arith.constant 0 : i32
    %c0_i32_0 = arith.constant 0 : i32
    %c0_i32_1 = arith.constant 0 : i32
    return %c0_i32, %c0_i32_0 : i32, i32
  }
  func.func @transform_8(%arg0: i32, %arg1: i32) -> (i32, i32, i32) {
    %c0_i32 = arith.constant 0 : i32
    %c0_i32_0 = arith.constant 0 : i32
    return %arg0, %c0_i32, %arg1 : i32, i32, i32
  }
}

</mosaic_0001>

<llo_original>
// kernel: tpu_custom_call.1
$region0: #{tpu_custom_call.1}
  #allocation0 [shape = 'u32[]', space=smem, size = 0x4, offset = 0x4, fixed_abs, tag = 'smem constant byte address 0x4 - core index']
  #allocation1 [shape = 'u32[144,128]{1,0:T(1,128)}', space=vmem, size = 0x12000, scoped, tag = 'internal scratch']
  %s0 = inlined_call_operand.vmem [shape: f32[2,4,256], index: 0, kind: input, shape index: {}]
  %s1 = inlined_call_operand.vmem [shape: f32[8,1,256], index: 1, kind: input, shape index: {}]
  %s2 = inlined_call_operand.vmem [shape: f32[5,4,1], index: 2, kind: input, shape index: {}]
  %s3 = inlined_call_operand.vmem [shape: f32[4,1], index: 3, kind: input, shape index: {}]
  %s4 = inlined_call_operand.vmem [shape: f32[5,4,1], index: 4, kind: input, shape index: {}]
  %s5 = inlined_call_operand.vmem [shape: f32[4,1], index: 5, kind: input, shape index: {}]
  %s6 = inlined_call_operand.vmem [shape: f32[4,4], index: 6, kind: input, shape index: {}]
  %s7 = inlined_call_operand.vmem [shape: f32[4,1], index: 7, kind: input, shape index: {}]
  %s8 = inlined_call_operand.hbm [shape: f32[2,4,256], index: 8, kind: output, shape index: {}]
  %s9 = sld [smem:[#allocation0]]
  $region65: #{tpu_custom_call.1} parent=0
    _
  %s11 = ssub.s32 1, %s9
  %s12 = scalar_select 0, %s11, %s9
  $region1: #{tpu_custom_call.1} parent=0
    #allocation2 [shape = 'u8[8192]{0}', space=vmem, size = 0x2000, scoped, tag = 'output window, operand 0']
    #allocation3 [shape = 's32[2]{0}', space=sflag, size = 0x8, scoped, tag = 'scoped memory for tpu_custom_call.1']
    %13 = vsyncpa [#allocation3], 0
    %s14 = scalar_lea.sflag [#allocation3], 1
    %15 = vsyncpa %s14, 0
    loop: start=0, step=1, limit=4
    $region2: #{tpu_custom_call.1} parent=1 // loop_pre_header
      _
    $region3: #{tpu_custom_call.1} parent=1 // loop_header
      %s17 = sphi 0, %s21
      %p18 = scmp.ge.s32.totalorder %s17, 4
      %s24 = sphi 0, %s36
      %s25 = sphi 0, %s32
      %s26 = sphi 0, %s24
      %s27 = sphi 0, %s25
      %s28 = sphi 0, %s26
      %s29 = sphi 0, %s27
      %s41 = sphi 0, %s43
      %s44 = sphi 0, %s41
      %s45 = sphi 0, %s44
      %s61 = sphi 0, %s45
      %s65 = sphi 0, %s65
      %s67 = sphi 0, %s65
      %s68 = sphi 0, %s67
      %s82 = sphi 0, %s68
      %s86 = sphi 0, %s86
      %s88 = sphi 0, %s86
      %s89 = sphi 0, %s88
      %s103 = sphi 0, %s89
      %s107 = sphi 0, %s107
      %s109 = sphi 0, %s107
      %s110 = sphi 0, %s109
      %s124 = sphi 0, %s110
      %s128 = sphi 0, %s128
      %s130 = sphi 0, %s128
      %s131 = sphi 0, %s130
      %s145 = sphi 0, %s131
      %s149 = sphi 0, %s149
      %s151 = sphi 0, %s149
      %s152 = sphi 0, %s151
      %s166 = sphi 0, %s152
      %s170 = sphi 0, %s170
      %s172 = sphi 0, %s170
      %s173 = sphi 0, %s172
      %s187 = sphi 0, %s173
      %s191 = sphi 0, %s191
      %s193 = sphi 0, %s191
      %s194 = sphi 0, %s193
      %s208 = sphi 0, %s194
      %s216 = sphi 0, %s218
      %s219 = sphi 0, %s216
      %s220 = sphi 0, %s219
      %s236 = sphi 0, %s220
    $region4: #{tpu_custom_call.1} parent=1 // loop_header_branch
      %20 = sbr.rel (%p18) target = $region8
    $region5: #{tpu_custom_call.1} parent=1 // loop_body
      %s22 = ssub.s32 %s17, 1
      %s23 = ssub.s32 %s17, 2
      %s30 = sadd.s32 1, %s25
      %p31 = scmp.ge.s32.totalorder %s30, 1
      %s32 = scalar_select %p31, 0, %s30
      %s33 = sadd.s32 1, %s24
      %s34 = scalar_select %p31, %s33, %s24
      %p35 = scmp.ge.s32.totalorder %s34, 2
      %s36 = scalar_select %p35, 0, %s34
      %s37 = ssub.s32 %s24, %s36
      %s38 = ssub.s32 %s25, %s32
      %s39 = sor.u32 %s37, %s38
      %p40 = scmp.eq.s32.totalorder %s39, 0
      %s42 = sadd.s32 %s41, 1
      %s43 = scalar_select %p40, %s41, %s42
      %p46 = pneg %p40
      %p47 = scmp.eq.s32.totalorder %s17, 1
      %p48 = por %p46, %p47
      %p49 = scmp.ne.s32.totalorder %s41, %s44
      %p50 = scmp.eq.s32.totalorder %s17, 0
      %p51 = por %p49, %p50
      %p52 = scmp.ne.s32.totalorder %s41, %s44
      %p53 = scmp.eq.s32.totalorder %s22, 1
      %p54 = por %p52, %p53
      %p55 = scmp.ne.s32.totalorder %s44, %s45
      %p56 = scmp.eq.s32.totalorder %s22, 0
      %p57 = por %p55, %p56
      %p58 = scmp.ne.s32.totalorder %s44, %s45
      %p59 = scmp.eq.s32.totalorder %s23, 1
      %p60 = por %p58, %p59
      %p62 = scmp.ne.s32.totalorder %s45, %s61
      %p63 = scmp.eq.s32.totalorder %s23, 0
      %p64 = por %p62, %p63
      %s66 = sadd.s32 %s65, 1
      %p69 = scmp.eq.s32.totalorder %s17, 1
      %p70 = scmp.ne.s32.totalorder %s65, %s67
      %p71 = scmp.eq.s32.totalorder %s17, 0
      %p72 = por %p70, %p71
      %p73 = scmp.ne.s32.totalorder %s65, %s67
      %p74 = scmp.eq.s32.totalorder %s22, 1
      %p75 = por %p73, %p74
      %p76 = scmp.ne.s32.totalorder %s67, %s68
      %p77 = scmp.eq.s32.totalorder %s22, 0
      %p78 = por %p76, %p77
      %p79 = scmp.ne.s32.totalorder %s67, %s68
      %p80 = scmp.eq.s32.totalorder %s23, 1
      %p81 = por %p79, %p80
      %p83 = scmp.ne.s32.totalorder %s68, %s82
      %p84 = scmp.eq.s32.totalorder %s23, 0
      %p85 = por %p83, %p84
      %s87 = sadd.s32 %s86, 1
      %p90 = scmp.eq.s32.totalorder %s17, 1
      %p91 = scmp.ne.s32.totalorder %s86, %s88
      %p92 = scmp.eq.s32.totalorder %s17, 0
      %p93 = por %p91, %p92
      %p94 = scmp.ne.s32.totalorder %s86, %s88
      %p95 = scmp.eq.s32.totalorder %s22, 1
      %p96 = por %p94, %p95
      %p97 = scmp.ne.s32.totalorder %s88, %s89
      %p98 = scmp.eq.s32.totalorder %s22, 0
      %p99 = por %p97, %p98
      %p100 = scmp.ne.s32.totalorder %s88, %s89
      %p101 = scmp.eq.s32.totalorder %s23, 1
      %p102 = por %p100, %p101
      %p104 = scmp.ne.s32.totalorder %s89, %s103
      %p105 = scmp.eq.s32.totalorder %s23, 0
      %p106 = por %p104, %p105
      %s108 = sadd.s32 %s107, 1
      %p111 = scmp.eq.s32.totalorder %s17, 1
      %p112 = scmp.ne.s32.totalorder %s107, %s109
      %p113 = scmp.eq.s32.totalorder %s17, 0
      %p114 = por %p112, %p113
      %p115 = scmp.ne.s32.totalorder %s107, %s109
      %p116 = scmp.eq.s32.totalorder %s22, 1
      %p117 = por %p115, %p116
      %p118 = scmp.ne.s32.totalorder %s109, %s110
      %p119 = scmp.eq.s32.totalorder %s22, 0
      %p120 = por %p118, %p119
      %p121 = scmp.ne.s32.totalorder %s109, %s110
      %p122 = scmp.eq.s32.totalorder %s23, 1
      %p123 = por %p121, %p122
      %p125 = scmp.ne.s32.totalorder %s110, %s124
      %p126 = scmp.eq.s32.totalorder %s23, 0
      %p127 = por %p125, %p126
      %s129 = sadd.s32 %s128, 1
      %p132 = scmp.eq.s32.totalorder %s17, 1
      %p133 = scmp.ne.s32.totalorder %s128, %s130
      %p134 = scmp.eq.s32.totalorder %s17, 0
      %p135 = por %p133, %p134
      %p136 = scmp.ne.s32.totalorder %s128, %s130
      %p137 = scmp.eq.s32.totalorder %s22, 1
      %p138 = por %p136, %p137
      %p139 = scmp.ne.s32.totalorder %s130, %s131
      %p140 = scmp.eq.s32.totalorder %s22, 0
      %p141 = por %p139, %p140
      %p142 = scmp.ne.s32.totalorder %s130, %s131
      %p143 = scmp.eq.s32.totalorder %s23, 1
      %p144 = por %p142, %p143
      %p146 = scmp.ne.s32.totalorder %s131, %s145
      %p147 = scmp.eq.s32.totalorder %s23, 0
      %p148 = por %p146, %p147
      %s150 = sadd.s32 %s149, 1
      %p153 = scmp.eq.s32.totalorder %s17, 1
      %p154 = scmp.ne.s32.totalorder %s149, %s151
      %p155 = scmp.eq.s32.totalorder %s17, 0
      %p156 = por %p154, %p155
      %p157 = scmp.ne.s32.totalorder %s149, %s151
      %p158 = scmp.eq.s32.totalorder %s22, 1
      %p159 = por %p157, %p158
      %p160 = scmp.ne.s32.totalorder %s151, %s152
      %p161 = scmp.eq.s32.totalorder %s22, 0
      %p162 = por %p160, %p161
      %p163 = scmp.ne.s32.totalorder %s151, %s152
      %p164 = scmp.eq.s32.totalorder %s23, 1
      %p165 = por %p163, %p164
      %p167 = scmp.ne.s32.totalorder %s152, %s166
      %p168 = scmp.eq.s32.totalorder %s23, 0
      %p169 = por %p167, %p168
      %s171 = sadd.s32 %s170, 1
      %p174 = scmp.eq.s32.totalorder %s17, 1
      %p175 = scmp.ne.s32.totalorder %s170, %s172
      %p176 = scmp.eq.s32.totalorder %s17, 0
      %p177 = por %p175, %p176
      %p178 = scmp.ne.s32.totalorder %s170, %s172
      %p179 = scmp.eq.s32.totalorder %s22, 1
      %p180 = por %p178, %p179
      %p181 = scmp.ne.s32.totalorder %s172, %s173
      %p182 = scmp.eq.s32.totalorder %s22, 0
      %p183 = por %p181, %p182
      %p184 = scmp.ne.s32.totalorder %s172, %s173
      %p185 = scmp.eq.s32.totalorder %s23, 1
      %p186 = por %p184, %p185
      %p188 = scmp.ne.s32.totalorder %s173, %s187
      %p189 = scmp.eq.s32.totalorder %s23, 0
      %p190 = por %p188, %p189
      %s192 = sadd.s32 %s191, 1
      %p195 = scmp.eq.s32.totalorder %s17, 1
      %p196 = scmp.ne.s32.totalorder %s191, %s193
      %p197 = scmp.eq.s32.totalorder %s17, 0
      %p198 = por %p196, %p197
      %p199 = scmp.ne.s32.totalorder %s191, %s193
      %p200 = scmp.eq.s32.totalorder %s22, 1
      %p201 = por %p199, %p200
      %p202 = scmp.ne.s32.totalorder %s193, %s194
      %p203 = scmp.eq.s32.totalorder %s22, 0
      %p204 = por %p202, %p203
      %p205 = scmp.ne.s32.totalorder %s193, %s194
      %p206 = scmp.eq.s32.totalorder %s23, 1
      %p207 = por %p205, %p206
      %p209 = scmp.ne.s32.totalorder %s194, %s208
      %p210 = scmp.eq.s32.totalorder %s23, 0
      %p211 = por %p209, %p210
      %s212 = ssub.s32 %s24, %s36
      %s213 = ssub.s32 %s25, %s32
      %s214 = sor.u32 %s212, %s213
      %p215 = scmp.eq.s32.totalorder %s214, 0
      %s217 = sadd.s32 %s216, 1
      %s218 = scalar_select %p215, %s216, %s217
      %p221 = pneg %p215
      %p222 = scmp.eq.s32.totalorder %s17, 1
      %p223 = por %p221, %p222
      %p224 = scmp.ne.s32.totalorder %s216, %s219
      %p225 = scmp.eq.s32.totalorder %s17, 0
      %p226 = por %p224, %p225
      %p227 = scmp.ne.s32.totalorder %s216, %s219
      %p228 = scmp.eq.s32.totalorder %s22, 1
      %p229 = por %p227, %p228
      %p230 = scmp.ne.s32.totalorder %s219, %s220
      %p231 = scmp.eq.s32.totalorder %s22, 0
      %p232 = por %p230, %p231
      %p233 = scmp.ne.s32.totalorder %s219, %s220
      %p234 = scmp.eq.s32.totalorder %s23, 1
      %p235 = por %p233, %p234
      %p237 = scmp.ne.s32.totalorder %s220, %s236
      %p238 = scmp.eq.s32.totalorder %s23, 0
      %p239 = por %p237, %p238
      %p240 = scmp.le.s32.totalorder 1, %s17
      %p241 = scmp.lt.s32.totalorder %s17, 3
      %p242 = pnand %p240, %p241
      %p243 = pneg %p242
      // Predicated region
      $region9: #{tpu_custom_call.1} parent=5 // pred_check
        _
      $region10: #{tpu_custom_call.1} parent=5 // pred_check_branch
        %245 = sbr.rel (%p242) target = $region12
      $region11: #{tpu_custom_call.1} parent=5 // pred_region
        %s246 = ssub.s32 %s17, 1
        // Predicated region
        $region13: #{tpu_custom_call.1} parent=11 // pred_check
          %p247 = pneg %p78
        $region14: #{tpu_custom_call.1} parent=11 // pred_check_branch
          %249 = sbr.rel (%p247) target = $region16
        $region15: #{tpu_custom_call.1} parent=11 // pred_region
          _
        $region16: #{tpu_custom_call.1} parent=11 // pred_fallthru
          _
        // Predicated region
        $region17: #{tpu_custom_call.1} parent=11 // pred_check
          %p250 = pneg %p99
        $region18: #{tpu_custom_call.1} parent=11 // pred_check_branch
          %252 = sbr.rel (%p250) target = $region20
        $region19: #{tpu_custom_call.1} parent=11 // pred_region
          _
        $region20: #{tpu_custom_call.1} parent=11 // pred_fallthru
          _
        // Predicated region
        $region21: #{tpu_custom_call.1} parent=11 // pred_check
          %p253 = pneg %p120
        $region22: #{tpu_custom_call.1} parent=11 // pred_check_branch
          %255 = sbr.rel (%p253) target = $region24
        $region23: #{tpu_custom_call.1} parent=11 // pred_region
          _
        $region24: #{tpu_custom_call.1} parent=11 // pred_fallthru
          _
        // Predicated region
        $region25: #{tpu_custom_call.1} parent=11 // pred_check
          %p256 = pneg %p141
        $region26: #{tpu_custom_call.1} parent=11 // pred_check_branch
          %258 = sbr.rel (%p256) target = $region28
        $region27: #{tpu_custom_call.1} parent=11 // pred_region
          _
        $region28: #{tpu_custom_call.1} parent=11 // pred_fallthru
          _
        // Predicated region
        $region29: #{tpu_custom_call.1} parent=11 // pred_check
          %p259 = pneg %p162
        $region30: #{tpu_custom_call.1} parent=11 // pred_check_branch
          %261 = sbr.rel (%p259) target = $region32
        $region31: #{tpu_custom_call.1} parent=11 // pred_region
          _
        $region32: #{tpu_custom_call.1} parent=11 // pred_fallthru
          _
        // Predicated region
        $region33: #{tpu_custom_call.1} parent=11 // pred_check
          %p262 = pneg %p183
        $region34: #{tpu_custom_call.1} parent=11 // pred_check_branch
          %264 = sbr.rel (%p262) target = $region36
        $region35: #{tpu_custom_call.1} parent=11 // pred_region
          _
        $region36: #{tpu_custom_call.1} parent=11 // pred_fallthru
          _
        // Predicated region
        $region37: #{tpu_custom_call.1} parent=11 // pred_check
          %p265 = pneg %p204
        $region38: #{tpu_custom_call.1} parent=11 // pred_check_branch
          %267 = sbr.rel (%p265) target = $region40
        $region39: #{tpu_custom_call.1} parent=11 // pred_region
          _
        $region40: #{tpu_custom_call.1} parent=11 // pred_fallthru
          _
      $region12: #{tpu_custom_call.1} parent=5 // pred_fallthru
        _
      %p268 = scmp.lt.s32.totalorder %s17, 2
      // Predicated region
      $region41: #{tpu_custom_call.1} parent=5 // pred_check
        %p269 = pneg %p268
      $region42: #{tpu_custom_call.1} parent=5 // pred_check_branch
        %271 = sbr.rel (%p269) target = $region44
      $region43: #{tpu_custom_call.1} parent=5 // pred_region
        // Predicated region
        $region45: #{tpu_custom_call.1} parent=43 // pred_check
          %p272 = pneg %p51
        $region46: #{tpu_custom_call.1} parent=43 // pred_check_branch
          %274 = sbr.rel (%p272) target = $region48
        $region47: #{tpu_custom_call.1} parent=43 // pred_region
          %s275 = smul.u32 2, %s25
          %p276 = scmp.lt.s32.totalorder %s24, 1
          %s277 = scalar_select %p276, %s24, 1
          %p278 = scmp.lt.s32.totalorder %s275, 1
          %s279 = scalar_select %p278, %s275, 1
          %s280 = smul.addr %s277, 2
          %s281 = sadd.s32 %s279, %s280
          %s282 = smul.addr %s281, 4
          %s283 = scalar_lea.vmem %s0, %s282
          %s284 = smul.u32 2, %s25
        $region48: #{tpu_custom_call.1} parent=43 // pred_fallthru
          _
      $region44: #{tpu_custom_call.1} parent=5 // pred_fallthru
        _
      %p285 = scmp.le.s32.totalorder 1, %s17
      %p286 = scmp.lt.s32.totalorder %s17, 3
      %p287 = pnand %p285, %p286
      %p288 = pneg %p287
      // Predicated region
      $region49: #{tpu_custom_call.1} parent=5 // pred_check
        _
      $region50: #{tpu_custom_call.1} parent=5 // pred_check_branch
        %290 = sbr.rel (%p287) target = $region52
      $region51: #{tpu_custom_call.1} parent=5 // pred_region
        %s291 = ssub.s32 %s17, 1
        %s292 = smul.u32 2, %s27
        %p293 = scmp.lt.s32.totalorder %s26, 1
        %s294 = scalar_select %p293, %s26, 1
        %p295 = scmp.lt.s32.totalorder %s292, 1
        %s296 = scalar_select %p295, %s292, 1
        %s297 = smul.addr %s294, 2
        %s298 = sadd.s32 %s296, %s297
        %s299 = smul.addr %s298, 4
        %s300 = scalar_lea.vmem %s0, %s299
        %p301 = pneg %p57
        %p302 = pneg %p54
        %p303 = pneg %p78
        %p304 = pneg %p75
        %p305 = pneg %p99
        %p306 = pneg %p96
        %p307 = pneg %p120
        %p308 = pneg %p117
        %p309 = pneg %p141
        %p310 = pneg %p138
        %p311 = pneg %p162
        %p312 = pneg %p159
        %p313 = pneg %p183
        %p314 = pneg %p180
        %p315 = pneg %p204
        %p316 = pneg %p201
        %p317 = pneg %p232
        %p318 = pneg %p229
        %s319 = sand.u32 %s219, 1
        %s320 = scalar_lea.sflag [#allocation3], %s319
        %s321 = sand.u32 %s219, 1
        %s322 = smul.addr %s321, 8
        %s323 = scalar_lea.vmem [#allocation2], %s322
        %s324 = smul.u32 2, %s27
        %p325 = scmp.lt.s32.totalorder %s26, 1
        %s326 = scalar_select %p325, %s26, 1
        %p327 = scmp.lt.s32.totalorder %s324, 1
        %s328 = scalar_select %p327, %s324, 1
        %s329 = smul.addr %s326, 2
        %s330 = sadd.s32 %s328, %s329
        %s331 = smul.addr %s330, 4
        %s332 = scalar_lea.vmem %s0, %s331
        %s333 = smul.u32 2, %s27
        %s334 = smul.u32 2, %s27
        %v335 = vld [vmem:[%s332] sm:$0xff]
        %v336 = vld [vmem:[%s2] sm:$0xf]
        %v338 = vcombine.high %v335, %v335
        %340 = vrot.lane.b32.xlu0 %v335, 2
        %v341 = vpop.permute.xlu0 %340
        %342 = vrot.lane.b32.xlu0 %v338, 2
        %v343 = vpop.permute.xlu0 %342
        %v344 = vlaneseq
        %v345 = vand.u32 %v344, 127
        %vm346 = vcmp.lt.s32.totalorder %v345, 2
        %v347 = vsel %vm346, %v341, %v343
        %v348 = vsel %vm346, %v343, %v341
        %s349 = scalar_lea.vmem %s1, 4
        %v350 = vld [vmem:[%s349] sm:$0x3]
        %v352 = vlaneseq
        %v353 = vshrl.u32 %v352, 7
        %v354 = vsub.s32 0, %v353
        %v355 = vrot.slane %v350, %v354
        %v356 = vlaneseq
        %v357 = vshrl.u32 %v356, 7
        %v358 = vsub.s32 1, %v357
        %v359 = vrot.slane %v350, %v358
        %v362 = vmul.f32 %v348, %v355
        %v363 = vmul.f32 %v347, %v359
        %365 = vset.pattern.permute.xlu0 0
        %366 = vperm.xlu0 %365, %v336
        %v367 = vpop.permute.xlu0 %366
        %v369 = vmul.f32 %v367, %v362
        %v370 = vmul.f32 %v367, %v363
        %s371 = scalar_lea.vmem %s2, 4
        %v372 = vld [vmem:[%s371] sm:$0xf]
        %373 = vrot.lane.b32.xlu0 %v335, 1
        %v374 = vpop.permute.xlu0 %373
        %375 = vrot.lane.b32.xlu0 %v338, 1
        %v376 = vpop.permute.xlu0 %375
        %vm377 = vcmp.lt.s32.totalorder %v345, 1
        %v378 = vsel %vm377, %v374, %v376
        %v379 = vsel %vm377, %v376, %v374
        %s380 = scalar_lea.vmem %s1, 6
        %v381 = vld [vmem:[%s380] sm:$0x3]
        %v383 = vlaneseq
        %v384 = vshrl.u32 %v383, 7
        %v385 = vsub.s32 0, %v384
        %v386 = vrot.slane %v381, %v385
        %v387 = vlaneseq
        %v388 = vshrl.u32 %v387, 7
        %v389 = vsub.s32 1, %v388
        %v390 = vrot.slane %v381, %v389
        %v393 = vmul.f32 %v379, %v386
        %v394 = vmul.f32 %v378, %v390
        %396 = vset.pattern.permute.xlu0 0
        %397 = vperm.xlu0 %396, %v372
        %v398 = vpop.permute.xlu0 %397
        %v400 = vmul.f32 %v398, %v393
        %v401 = vmul.f32 %v398, %v394
        %v402 = vadd.f32 %v369, %v400
        %v403 = vadd.f32 %v370, %v401
        %s404 = scalar_lea.vmem %s2, 8
        %v405 = vld [vmem:[%s404] sm:$0xf]
        %407 = vset.pattern.permute.xlu0 0
        %408 = vperm.xlu0 %407, %v405
        %v409 = vpop.permute.xlu0 %408
        %v411 = vmul.f32 %v409, %v335
        %v412 = vmul.f32 %v409, %v338
        %v413 = vadd.f32 %v402, %v411
        %v414 = vadd.f32 %v403, %v412
        %s415 = scalar_lea.vmem %s2, 12
        %v416 = vld [vmem:[%s415] sm:$0xf]
        %417 = vrot.lane.b32.xlu0 %v335, 127
        %v418 = vpop.permute.xlu0 %417
        %419 = vrot.lane.b32.xlu0 %v338, 127
        %v420 = vpop.permute.xlu0 %419
        %vm421 = vcmp.lt.s32.totalorder %v345, 127
        %v422 = vsel %vm421, %v418, %v420
        %v423 = vsel %vm421, %v420, %v418
        %s424 = scalar_lea.vmem %s1, 8
        %v425 = vld [vmem:[%s424] sm:$0x3]
        %v427 = vlaneseq
        %v428 = vshrl.u32 %v427, 7
        %v429 = vsub.s32 0, %v428
        %v430 = vrot.slane %v425, %v429
        %v431 = vlaneseq
        %v432 = vshrl.u32 %v431, 7
        %v433 = vsub.s32 1, %v432
        %v434 = vrot.slane %v425, %v433
        %v437 = vmul.f32 %v422, %v430
        %v438 = vmul.f32 %v423, %v434
        %440 = vset.pattern.permute.xlu0 0
        %441 = vperm.xlu0 %440, %v416
        %v442 = vpop.permute.xlu0 %441
        %v444 = vmul.f32 %v442, %v437
        %v445 = vmul.f32 %v442, %v438
        %v446 = vadd.f32 %v413, %v444
        %v447 = vadd.f32 %v414, %v445
        %s448 = scalar_lea.vmem %s2, 16
        %v449 = vld [vmem:[%s448] sm:$0xf]
        %450 = vrot.lane.b32.xlu0 %v335, 126
        %v451 = vpop.permute.xlu0 %450
        %452 = vrot.lane.b32.xlu0 %v338, 126
        %v453 = vpop.permute.xlu0 %452
        %vm454 = vcmp.lt.s32.totalorder %v345, 126
        %v455 = vsel %vm454, %v451, %v453
        %v456 = vsel %vm454, %v453, %v451
        %s457 = scalar_lea.vmem %s1, 10
        %v458 = vld [vmem:[%s457] sm:$0x3]
        %v460 = vlaneseq
        %v461 = vshrl.u32 %v460, 7
        %v462 = vsub.s32 0, %v461
        %v463 = vrot.slane %v458, %v462
        %v464 = vlaneseq
        %v465 = vshrl.u32 %v464, 7
        %v466 = vsub.s32 1, %v465
        %v467 = vrot.slane %v458, %v466
        %v470 = vmul.f32 %v455, %v463
        %v471 = vmul.f32 %v456, %v467
        %473 = vset.pattern.permute.xlu0 0
        %474 = vperm.xlu0 %473, %v449
        %v475 = vpop.permute.xlu0 %474
        %v477 = vmul.f32 %v475, %v470
        %v478 = vmul.f32 %v475, %v471
        %v479 = vadd.f32 %v446, %v477
        %v480 = vadd.f32 %v447, %v478
        %v481 = vld [vmem:[%s3] sm:$0xf]
        %483 = vset.pattern.permute.xlu0 0
        %484 = vperm.xlu0 %483, %v481
        %v485 = vpop.permute.xlu0 %484
        %v487 = vadd.f32 %v479, %v485
        %v488 = vadd.f32 %v480, %v485
        %v489 = vld [vmem:[%s4] sm:$0xf]
        %490 = vrot.lane.b32.xlu0 %v487, 6
        %v491 = vpop.permute.xlu0 %490
        %492 = vrot.lane.b32.xlu0 %v488, 6
        %v493 = vpop.permute.xlu0 %492
        %vm494 = vcmp.lt.s32.totalorder %v345, 6
        %v495 = vsel %vm494, %v491, %v493
        %v496 = vsel %vm494, %v493, %v491
        %v497 = vld [vmem:[%s1] sm:$0x3]
        %v499 = vlaneseq
        %v500 = vshrl.u32 %v499, 7
        %v501 = vsub.s32 0, %v500
        %v502 = vrot.slane %v497, %v501
        %v503 = vlaneseq
        %v504 = vshrl.u32 %v503, 7
        %v505 = vsub.s32 1, %v504
        %v506 = vrot.slane %v497, %v505
        %v509 = vmul.f32 %v496, %v502
        %v510 = vmul.f32 %v495, %v506
        %512 = vset.pattern.permute.xlu0 0
        %513 = vperm.xlu0 %512, %v489
        %v514 = vpop.permute.xlu0 %513
        %v516 = vmul.f32 %v514, %v509
        %v517 = vmul.f32 %v514, %v510
        %s518 = scalar_lea.vmem %s4, 4
        %v519 = vld [vmem:[%s518] sm:$0xf]
        %520 = vrot.lane.b32.xlu0 %v487, 3
        %v521 = vpop.permute.xlu0 %520
        %522 = vrot.lane.b32.xlu0 %v488, 3
        %v523 = vpop.permute.xlu0 %522
        %vm524 = vcmp.lt.s32.totalorder %v345, 3
        %v525 = vsel %vm524, %v521, %v523
        %v526 = vsel %vm524, %v523, %v521
        %s527 = scalar_lea.vmem %s1, 2
        %v528 = vld [vmem:[%s527] sm:$0x3]
        %v530 = vlaneseq
        %v531 = vshrl.u32 %v530, 7
        %v532 = vsub.s32 0, %v531
        %v533 = vrot.slane %v528, %v532
        %v534 = vlaneseq
        %v535 = vshrl.u32 %v534, 7
        %v536 = vsub.s32 1, %v535
        %v537 = vrot.slane %v528, %v536
        %v540 = vmul.f32 %v526, %v533
        %v541 = vmul.f32 %v525, %v537
        %543 = vset.pattern.permute.xlu0 0
        %544 = vperm.xlu0 %543, %v519
        %v545 = vpop.permute.xlu0 %544
        %v547 = vmul.f32 %v545, %v540
        %v548 = vmul.f32 %v545, %v541
        %v549 = vadd.f32 %v516, %v547
        %v550 = vadd.f32 %v517, %v548
        %s551 = scalar_lea.vmem %s4, 8
        %v552 = vld [vmem:[%s551] sm:$0xf]
        %554 = vset.pattern.permute.xlu0 0
        %555 = vperm.xlu0 %554, %v552
        %v556 = vpop.permute.xlu0 %555
        %v558 = vmul.f32 %v556, %v487
        %v559 = vmul.f32 %v556, %v488
        %v560 = vadd.f32 %v549, %v558
        %v561 = vadd.f32 %v550, %v559
        %s562 = scalar_lea.vmem %s4, 12
        %v563 = vld [vmem:[%s562] sm:$0xf]
        %564 = vrot.lane.b32.xlu0 %v487, 125
        %v565 = vpop.permute.xlu0 %564
        %566 = vrot.lane.b32.xlu0 %v488, 125
        %v567 = vpop.permute.xlu0 %566
        %vm568 = vcmp.lt.s32.totalorder %v345, 125
        %v569 = vsel %vm568, %v565, %v567
        %v570 = vsel %vm568, %v567, %v565
        %s571 = scalar_lea.vmem %s1, 12
        %v572 = vld [vmem:[%s571] sm:$0x3]
        %v574 = vlaneseq
        %v575 = vshrl.u32 %v574, 7
        %v576 = vsub.s32 0, %v575
        %v577 = vrot.slane %v572, %v576
        %v578 = vlaneseq
        %v579 = vshrl.u32 %v578, 7
        %v580 = vsub.s32 1, %v579
        %v581 = vrot.slane %v572, %v580
        %v584 = vmul.f32 %v569, %v577
        %v585 = vmul.f32 %v570, %v581
        %587 = vset.pattern.permute.xlu0 0
        %588 = vperm.xlu0 %587, %v563
        %v589 = vpop.permute.xlu0 %588
        %v591 = vmul.f32 %v589, %v584
        %v592 = vmul.f32 %v589, %v585
        %v593 = vadd.f32 %v560, %v591
        %v594 = vadd.f32 %v561, %v592
        %s595 = scalar_lea.vmem %s4, 16
        %v596 = vld [vmem:[%s595] sm:$0xf]
        %597 = vrot.lane.b32.xlu0 %v487, 122
        %v598 = vpop.permute.xlu0 %597
        %599 = vrot.lane.b32.xlu0 %v488, 122
        %v600 = vpop.permute.xlu0 %599
        %vm601 = vcmp.lt.s32.totalorder %v345, 122
        %v602 = vsel %vm601, %v598, %v600
        %v603 = vsel %vm601, %v600, %v598
        %s604 = scalar_lea.vmem %s1, 14
        %v605 = vld [vmem:[%s604] sm:$0x3]
        %v607 = vlaneseq
        %v608 = vshrl.u32 %v607, 7
        %v609 = vsub.s32 0, %v608
        %v610 = vrot.slane %v605, %v609
        %v611 = vlaneseq
        %v612 = vshrl.u32 %v611, 7
        %v613 = vsub.s32 1, %v612
        %v614 = vrot.slane %v605, %v613
        %v617 = vmul.f32 %v602, %v610
        %v618 = vmul.f32 %v603, %v614
        %620 = vset.pattern.permute.xlu0 0
        %621 = vperm.xlu0 %620, %v596
        %v622 = vpop.permute.xlu0 %621
        %v624 = vmul.f32 %v622, %v617
        %v625 = vmul.f32 %v622, %v618
        %v626 = vadd.f32 %v593, %v624
        %v627 = vadd.f32 %v594, %v625
        %v628 = vld [vmem:[%s5] sm:$0xf]
        %630 = vset.pattern.permute.xlu0 0
        %631 = vperm.xlu0 %630, %v628
        %v632 = vpop.permute.xlu0 %631
        %v634 = vadd.f32 %v626, %v632
        %v635 = vadd.f32 %v627, %v632
        %v636 = vld [vmem:[%s6] sm:$0xf]
        %638 = vset.pattern.permute.xlu0 0
        %639 = vperm.xlu0 %638, %v636
        %v640 = vpop.permute.xlu0 %639
        %v642 = vlaneseq
        %v643 = vshrl.u32 %v642, 7
        %v644 = vsub.s32 0, %v643
        %v645 = vrot.slane %v634, %v644
        %v646 = vlaneseq
        %v647 = vshrl.u32 %v646, 7
        %v648 = vsub.s32 0, %v647
        %v649 = vrot.slane %v635, %v648
        %v650 = vmul.f32 %v640, %v645
        %v651 = vmul.f32 %v640, %v649
        %652 = vset.pattern.permute.xlu0 1
        %653 = vperm.xlu0 %652, %v636
        %v654 = vpop.permute.xlu0 %653
        %v656 = vlaneseq
        %v657 = vshrl.u32 %v656, 7
        %v658 = vsub.s32 1, %v657
        %v659 = vrot.slane %v634, %v658
        %v660 = vlaneseq
        %v661 = vshrl.u32 %v660, 7
        %v662 = vsub.s32 1, %v661
        %v663 = vrot.slane %v635, %v662
        %v664 = vmul.f32 %v654, %v659
        %v665 = vmul.f32 %v654, %v663
        %v666 = vadd.f32 %v650, %v664
        %v667 = vadd.f32 %v651, %v665
        %668 = vset.pattern.permute.xlu0 2
        %669 = vperm.xlu0 %668, %v636
        %v670 = vpop.permute.xlu0 %669
        %v672 = vlaneseq
        %v673 = vshrl.u32 %v672, 7
        %v674 = vsub.s32 2, %v673
        %v675 = vrot.slane %v634, %v674
        %v676 = vlaneseq
        %v677 = vshrl.u32 %v676, 7
        %v678 = vsub.s32 2, %v677
        %v679 = vrot.slane %v635, %v678
        %v680 = vmul.f32 %v670, %v675
        %v681 = vmul.f32 %v670, %v679
        %v682 = vadd.f32 %v666, %v680
        %v683 = vadd.f32 %v667, %v681
        %684 = vset.pattern.permute.xlu0 3
        %685 = vperm.xlu0 %684, %v636
        %v686 = vpop.permute.xlu0 %685
        %v688 = vlaneseq
        %v689 = vshrl.u32 %v688, 7
        %v690 = vsub.s32 3, %v689
        %v691 = vrot.slane %v634, %v690
        %v692 = vlaneseq
        %v693 = vshrl.u32 %v692, 7
        %v694 = vsub.s32 3, %v693
        %v695 = vrot.slane %v635, %v694
        %v696 = vmul.f32 %v686, %v691
        %v697 = vmul.f32 %v686, %v695
        %v698 = vadd.f32 %v682, %v696
        %v699 = vadd.f32 %v683, %v697
        %v700 = vld [vmem:[%s7] sm:$0xf]
        %702 = vset.pattern.permute.xlu0 0
        %703 = vperm.xlu0 %702, %v700
        %v704 = vpop.permute.xlu0 %703
        %v706 = vadd.f32 %v698, %v704
        %v707 = vadd.f32 %v699, %v704
        %v710 = vcombine.low %v706, %v707
        %v712 = vmul.f32 %v335, %v710
        %713 = vst [vmem:[%s323] sm:$0xff] %v712
        %s714 = sand.u32 %s219, 1
        %s715 = scalar_lea.sflag [#allocation3], %s714
        %s716 = sand.u32 %s219, 1
        %s717 = smul.addr %s716, 8
        %s718 = scalar_lea.vmem [#allocation2], %s717
        // Predicated region
        $region53: #{tpu_custom_call.1} parent=51 // pred_check
          %p719 = pneg %p229
        $region54: #{tpu_custom_call.1} parent=51 // pred_check_branch
          %721 = sbr.rel (%p719) target = $region56
        $region55: #{tpu_custom_call.1} parent=51 // pred_region
          %s722 = smul.u32 2, %s27
          %s724 = ssub.s32 128, 128
          %725 = vsyncadd %s715, %s724
          %s726 = smul.addr %s26, 2
          %s727 = sadd.s32 %s722, %s726
          %s728 = smul.addr %s727, 64
          %s729 = scalar_lea.hbm %s8, %s728
          %s731 = sshll.u32 %s718, 4
          %s732 = int_to_ptr.vmem [resolvable:$true] %s731
          %734 = dma.vmem_to_hbm [thread:$0]  %s732, 128, %s729, %s715
        $region56: #{tpu_custom_call.1} parent=51 // pred_fallthru
          _
      $region52: #{tpu_custom_call.1} parent=5 // pred_fallthru
        _
      %p735 = scmp.le.s32.totalorder 2, %s17
      // Predicated region
      $region57: #{tpu_custom_call.1} parent=5 // pred_check
        %p736 = pneg %p735
      $region58: #{tpu_custom_call.1} parent=5 // pred_check_branch
        %738 = sbr.rel (%p736) target = $region60
      $region59: #{tpu_custom_call.1} parent=5 // pred_region
        %s739 = ssub.s32 %s17, 2
        // Predicated region
        $region61: #{tpu_custom_call.1} parent=59 // pred_check
          %p740 = pneg %p235
        $region62: #{tpu_custom_call.1} parent=59 // pred_check_branch
          %742 = sbr.rel (%p740) target = $region64
        $region63: #{tpu_custom_call.1} parent=59 // pred_region
          %s743 = sand.u32 %s220, 1
          %s744 = scalar_lea.sflag [#allocation3], %s743
          %s745 = sand.u32 %s220, 1
          %s746 = smul.addr %s745, 8
          %s747 = scalar_lea.vmem [#allocation2], %s746
          %748 = dma.done %s744, 128
        $region64: #{tpu_custom_call.1} parent=59 // pred_fallthru
          _
      $region60: #{tpu_custom_call.1} parent=5 // pred_fallthru
        _
    $region6: #{tpu_custom_call.1} parent=1 // loop_footer
      %s21 = sadd.s32 1, %s17
    $region7: #{tpu_custom_call.1} parent=1 // loop_footer_branch
      %16 = sbr.rel target = $region3
    $region8: #{tpu_custom_call.1} parent=1 // loop_exit
      _
    %749 = vsyncpa [#allocation3], 1
    %s750 = scalar_lea.sflag [#allocation3], 1
    %751 = vsyncpa %s750, 1

</llo_original>
